<compile_context>
chip_gen: v6e
topology: v6e:2x2x1
jax: 0.10.0
libtpu: 0.0.40
codegen_flags: <defaults>
</compile_context>

<pallas_src>
import jax
import jax.numpy as jnp
from jax.experimental import pallas as pl
from jax.experimental.pallas import tpu as pltpu  # noqa: F401  (TPU backend)


def _linear_hardsigmoid_kernel(x_ref, w_ref, o_ref):
    # x_ref: (B, K+1) float32, last column is 1.0 (bias folded into w_ref's last row)
    # w_ref: (K+1, N) float32
    # o_ref: (B, N)   float32
    x = x_ref[...]
    w = w_ref[...]
    k_aug = x.shape[1]  # static (K + 1), unrolled at trace time

    # Unrolled VPU FMA: y = sum_k x[:, k] * w[k, :]   (includes the bias row)
    y = x[:, 0:1] * w[0:1, :]
    for k in range(1, k_aug):
        y = y + x[:, k : k + 1] * w[k : k + 1, :]

    # hard-sigmoid: clamp(y + 3, 0, 6) / 6
    o_ref[...] = jnp.clip(y + 3.0, 0.0, 6.0) * (1.0 / 6.0)


def linear_hardsigmoid(x, w, b):
    """x: (B, K) f32, w: (N, K) f32 (PyTorch Linear layout), b: (N,) f32."""
    B, K = x.shape
    N = w.shape[0]

    # Fold the bias into the matmul: append a ones column to x and the bias as
    # an extra row of the (transposed) weight. Removes the separate bias DMA.
    x_aug = jnp.concatenate([x, jnp.ones((B, 1), dtype=x.dtype)], axis=1)  # (B, K+1)
    w_aug = jnp.concatenate([w.T.astype(jnp.float32),
                             b.reshape(1, N).astype(jnp.float32)], axis=0)  # (K+1, N)

    bytes_accessed = 4 * (B * (K + 1) + (K + 1) * N + B * N)
    return pl.pallas_call(
        _linear_hardsigmoid_kernel,
        out_shape=jax.ShapeDtypeStruct((B, N), jnp.float32),
        # Tiny problem: single grid step, full-array blocks (legal even below (8,128)).
        in_specs=[
            pl.BlockSpec((B, K + 1), lambda: (0, 0)),
            pl.BlockSpec((K + 1, N), lambda: (0, 0)),
        ],
        out_specs=pl.BlockSpec((B, N), lambda: (0, 0)),
        cost_estimate=pl.CostEstimate(
            flops=2 * B * K * N + 3 * B * N,
            transcendentals=0,
            bytes_accessed=bytes_accessed,
        ),
    )(x_aug, w_aug)


if __name__ == "__main__":
    key = jax.random.PRNGKey(0)
    kx, kw, kb = jax.random.split(key, 3)

    B, K, N = 1, 3, 8  # matches nn.Linear(3, 8) applied to x1 = randn(1, 3)

    x1 = jax.random.normal(kx, (B, K), dtype=jnp.float32)
    # Deterministic synthetic params (mimics PyTorch uniform(-1/sqrt(K), 1/sqrt(K)))
    bound = 1.0 / (K ** 0.5)
    w = jax.random.uniform(kw, (N, K), minval=-bound, maxval=bound, dtype=jnp.float32)
    b = jax.random.uniform(kb, (N,), minval=-bound, maxval=bound, dtype=jnp.float32)

    out = linear_hardsigmoid(x1, w, b)
    out = jax.block_until_ready(out)

    # Reference check in plain JAX
    ref = jnp.clip(x1 @ w.T + b + 3.0, 0.0, 6.0) / 6.0
    assert out.shape == (B, N)
    assert jnp.allclose(out, ref, atol=1e-5, rtol=1e-5), (out, ref)

    print("KERNEL_OK")
</pallas_src>

<mosaic_0001>
module attributes {stable_mosaic.version = 11 : i64} {
  func.func @_linear_hardsigmoid_kernel(%arg0: memref<1x4xf32, #tpu.memory_space<vmem>>, %arg1: memref<4x8xf32, #tpu.memory_space<vmem>>, %arg2: memref<1x8xf32, #tpu.memory_space<vmem>>) attributes {dimension_semantics = [], scalar_prefetch = 0 : i64, scratch_operands = 0 : i64, tpu.core_type = #tpu.core_type<tc>} {
    %c0 = arith.constant 0 : index
    %c0_0 = arith.constant 0 : index
    %0 = vector.load %arg0[%c0, %c0_0] : memref<1x4xf32, #tpu.memory_space<vmem>>, vector<1x4xf32>
    %c0_1 = arith.constant 0 : index
    %c0_2 = arith.constant 0 : index
    %1 = vector.load %arg1[%c0_1, %c0_2] : memref<4x8xf32, #tpu.memory_space<vmem>>, vector<4x8xf32>
    %2 = vector.extract_strided_slice %0 {offsets = [0, 0], sizes = [1, 1], strides = [1, 1]} : vector<1x4xf32> to vector<1x1xf32>
    %3 = vector.extract_strided_slice %1 {offsets = [0, 0], sizes = [1, 8], strides = [1, 1]} : vector<4x8xf32> to vector<1x8xf32>
    %4 = vector.broadcast %2 : vector<1x1xf32> to vector<1x8xf32>
    %5 = arith.mulf %4, %3 : vector<1x8xf32>
    %6 = vector.extract_strided_slice %0 {offsets = [0, 1], sizes = [1, 1], strides = [1, 1]} : vector<1x4xf32> to vector<1x1xf32>
    %7 = vector.extract_strided_slice %1 {offsets = [1, 0], sizes = [1, 8], strides = [1, 1]} : vector<4x8xf32> to vector<1x8xf32>
    %8 = vector.broadcast %6 : vector<1x1xf32> to vector<1x8xf32>
    %9 = arith.mulf %8, %7 : vector<1x8xf32>
    %10 = arith.addf %5, %9 : vector<1x8xf32>
    %11 = vector.extract_strided_slice %0 {offsets = [0, 2], sizes = [1, 1], strides = [1, 1]} : vector<1x4xf32> to vector<1x1xf32>
    %12 = vector.extract_strided_slice %1 {offsets = [2, 0], sizes = [1, 8], strides = [1, 1]} : vector<4x8xf32> to vector<1x8xf32>
    %13 = vector.broadcast %11 : vector<1x1xf32> to vector<1x8xf32>
    %14 = arith.mulf %13, %12 : vector<1x8xf32>
    %15 = arith.addf %10, %14 : vector<1x8xf32>
    %16 = vector.extract_strided_slice %0 {offsets = [0, 3], sizes = [1, 1], strides = [1, 1]} : vector<1x4xf32> to vector<1x1xf32>
    %17 = vector.extract_strided_slice %1 {offsets = [3, 0], sizes = [1, 8], strides = [1, 1]} : vector<4x8xf32> to vector<1x8xf32>
    %18 = vector.broadcast %16 : vector<1x1xf32> to vector<1x8xf32>
    %19 = arith.mulf %18, %17 : vector<1x8xf32>
    %20 = arith.addf %15, %19 : vector<1x8xf32>
    %cst = arith.constant 3.000000e+00 : f32
    %21 = vector.broadcast %cst : f32 to vector<1x8xf32>
    %22 = arith.addf %20, %21 : vector<1x8xf32>
    %cst_3 = arith.constant 0.000000e+00 : f32
    %cst_4 = arith.constant 6.000000e+00 : f32
    %23 = vector.broadcast %cst_3 : f32 to vector<1x8xf32>
    %24 = arith.maximumf %23, %22 : vector<1x8xf32>
    %25 = vector.broadcast %cst_4 : f32 to vector<1x8xf32>
    %26 = arith.minimumf %25, %24 : vector<1x8xf32>
    %cst_5 = arith.constant 0.166666672 : f32
    %27 = vector.broadcast %cst_5 : f32 to vector<1x8xf32>
    %28 = arith.mulf %26, %27 : vector<1x8xf32>
    %c0_6 = arith.constant 0 : index
    %c0_7 = arith.constant 0 : index
    %29 = vector.load %arg2[%c0_6, %c0_7] : memref<1x8xf32, #tpu.memory_space<vmem>>, vector<1x8xf32>
    tpu.vector_store %arg2[%c0_6, %c0_7], %28 {strides = array<i32>} : memref<1x8xf32, #tpu.memory_space<vmem>>, vector<1x8xf32>,
    return
  }
}

</mosaic_0001>

<llo_original>
// kernel: tpu_custom_call.1
$region0: #{tpu_custom_call.1}
  #allocation0 [shape = 'u32[]', space=smem, size = 0x4, offset = 0x4, fixed_abs, tag = 'smem constant byte address 0x4 - core index']
  #allocation1 [shape = 'u32[144,128]{1,0:T(1,128)}', space=vmem, size = 0x12000, scoped, tag = 'internal scratch']
  %s0 = inlined_call_operand.hbm [shape: f32[1,4], index: 0, kind: input, shape index: {}]
  %s1 = inlined_call_operand.hbm [shape: f32[4,8], index: 1, kind: input, shape index: {}]
  %s2 = inlined_call_operand.hbm [shape: f32[1,8], index: 2, kind: output, shape index: {}]
  %s3 = sld [smem:[#allocation0]]
  $region26: #{tpu_custom_call.1} parent=0
    _
  %s5 = ssub.s32 1, %s3
  %s6 = scalar_select 0, %s5, %s3
  $region1: #{tpu_custom_call.1} parent=0
    #allocation2 [shape = 'u8[512]{0}', space=vmem, size = 0x400, scoped, tag = 'input window, operand 0, single buffered']
    #allocation3 [shape = 's32[1]{0}', space=sflag, size = 0x4, scoped, tag = 'scoped memory for tpu_custom_call.1']
    #allocation4 [shape = 's32[1]{0}', space=sflag, size = 0x4, scoped, tag = 'scoped memory for tpu_custom_call.1']
    #allocation5 [shape = 'u8[2048]{0}', space=vmem, size = 0x800, scoped, tag = 'input window, operand 1, single buffered']
    #allocation6 [shape = 's32[1]{0}', space=sflag, size = 0x4, scoped, tag = 'scoped memory for tpu_custom_call.1']
    #allocation7 [shape = 'u8[512]{0}', space=vmem, size = 0x400, scoped, tag = 'output window, operand 0, single buffered']
    %7 = vsyncpa [#allocation3], 0
    %8 = vsyncpa [#allocation6], 0
    %9 = vsyncpa [#allocation4], 0
    // Predicated region
    $region2: #{tpu_custom_call.1} parent=1 // pred_check
      _
    $region3: #{tpu_custom_call.1} parent=1 // pred_check_branch
      %11 = sbr.rel (0) target = $region5
    $region4: #{tpu_custom_call.1} parent=1 // pred_region
      %s13 = ssub.s32 16, 16
      %14 = vsyncadd [#allocation3], %s13
      %s16 = sshll.u32 [#allocation2], 4
      %s17 = int_to_ptr.vmem [resolvable:$true] %s16
      %19 = dma.hbm_to_vmem [thread:$0]  %s0, 16, %s17, [#allocation3]
    $region5: #{tpu_custom_call.1} parent=1 // pred_fallthru
      _
    // Predicated region
    $region6: #{tpu_custom_call.1} parent=1 // pred_check
      _
    $region7: #{tpu_custom_call.1} parent=1 // pred_check_branch
      %21 = sbr.rel (0) target = $region9
    $region8: #{tpu_custom_call.1} parent=1 // pred_region
      %s23 = ssub.s32 64, 64
      %24 = vsyncadd [#allocation6], %s23
      %s26 = sshll.u32 [#allocation5], 4
      %s27 = int_to_ptr.vmem [resolvable:$true] %s26
      %29 = dma.hbm_to_vmem [thread:$0]  %s1, 64, %s27, [#allocation6]
    $region9: #{tpu_custom_call.1} parent=1 // pred_fallthru
      _
    // Predicated region
    $region10: #{tpu_custom_call.1} parent=1 // pred_check
      _
    $region11: #{tpu_custom_call.1} parent=1 // pred_check_branch
      %31 = sbr.rel (0) target = $region13
    $region12: #{tpu_custom_call.1} parent=1 // pred_region
      %32 = dma.done [#allocation3], 16
    $region13: #{tpu_custom_call.1} parent=1 // pred_fallthru
      _
    // Predicated region
    $region14: #{tpu_custom_call.1} parent=1 // pred_check
      _
    $region15: #{tpu_custom_call.1} parent=1 // pred_check_branch
      %34 = sbr.rel (0) target = $region17
    $region16: #{tpu_custom_call.1} parent=1 // pred_region
      %35 = dma.done [#allocation6], 64
    $region17: #{tpu_custom_call.1} parent=1 // pred_fallthru
      _
    %v36 = vld [vmem:[#allocation2] sm:$0x1]
    %v37 = vld [vmem:[#allocation5] sm:$0xf]
    %39 = vset.pattern.permute.xlu0 0
    %40 = vperm.xlu0 %39, %v36
    %v41 = vpop.permute.xlu0 %40
    %v43 = vlaneseq
    %v44 = vshrl.u32 %v43, 7
    %v45 = vsub.s32 0, %v44
    %v46 = vrot.slane %v41, %v45
    %v47 = vmul.f32 %v46, %v37
    %48 = vset.pattern.permute.xlu0 1
    %49 = vperm.xlu0 %48, %v36
    %v50 = vpop.permute.xlu0 %49
    %v52 = vlaneseq
    %v53 = vshrl.u32 %v52, 7
    %v54 = vsub.s32 0, %v53
    %v55 = vrot.slane %v50, %v54
    %v56 = vmul.f32 %v55, %v37
    %v58 = vrot.slane %v56, 1
    %v60 = vadd.f32 %v47, %v58
    %61 = vset.pattern.permute.xlu0 2
    %62 = vperm.xlu0 %61, %v36
    %v63 = vpop.permute.xlu0 %62
    %v65 = vlaneseq
    %v66 = vshrl.u32 %v65, 7
    %v67 = vsub.s32 0, %v66
    %v68 = vrot.slane %v63, %v67
    %v69 = vmul.f32 %v68, %v37
    %v71 = vrot.slane %v69, 2
    %v73 = vadd.f32 %v60, %v71
    %74 = vset.pattern.permute.xlu0 3
    %75 = vperm.xlu0 %74, %v36
    %v76 = vpop.permute.xlu0 %75
    %v78 = vlaneseq
    %v79 = vshrl.u32 %v78, 7
    %v80 = vsub.s32 0, %v79
    %v81 = vrot.slane %v76, %v80
    %v82 = vmul.f32 %v81, %v37
    %v84 = vrot.slane %v82, 3
    %v86 = vadd.f32 %v73, %v84
    %v87 = vadd.f32 %v86, 3.0
    %v88 = vmax.f32 %v87, 0.0
    %v89 = vmin.f32 %v88, 6.0
    %v90 = vmul.f32 %v89, 0.16666667
    %vm91 = vcmask 57344
    %92 = vst.msk [vmem:[#allocation7] sm:$0x1] %vm91, %v90
    // Predicated region
    $region18: #{tpu_custom_call.1} parent=1 // pred_check
      _
    $region19: #{tpu_custom_call.1} parent=1 // pred_check_branch
      %94 = sbr.rel (0) target = $region21
    $region20: #{tpu_custom_call.1} parent=1 // pred_region
      %s96 = ssub.s32 16, 16
      %97 = vsyncadd [#allocation4], %s96
      %s99 = sshll.u32 [#allocation7], 4
      %s100 = int_to_ptr.vmem [resolvable:$true] %s99
      %102 = dma.vmem_to_hbm [thread:$0]  %s100, 16, %s2, [#allocation4]
    $region21: #{tpu_custom_call.1} parent=1 // pred_fallthru
      _
    // Predicated region
    $region22: #{tpu_custom_call.1} parent=1 // pred_check
      _
    $region23: #{tpu_custom_call.1} parent=1 // pred_check_branch
      %104 = sbr.rel (0) target = $region25
    $region24: #{tpu_custom_call.1} parent=1 // pred_region
      %105 = dma.done [#allocation4], 16
    $region25: #{tpu_custom_call.1} parent=1 // pred_fallthru
      _
    %106 = vsyncpa [#allocation3], 1
    %107 = vsyncpa [#allocation6], 1
    %108 = vsyncpa [#allocation4], 1

</llo_original>
